<compile_context>
chip_gen: v7x
topology: tpu7x:2x2x1
jax: 0.10.0
libtpu: 0.0.40
codegen_flags: <defaults>
</compile_context>

<pallas_src>
import functools

import jax
import jax.numpy as jnp
from jax import lax
from jax.experimental import pallas as pl
from jax.experimental.pallas import tpu as pltpu

_VMEM_LIMIT = 32 * 1024 * 1024          # valid on v5e/v6e/v7x
_COMPUTE_DTYPE = jnp.float32            # bf16 optional (see TODO above)


# ----------------------------------------------------------------------------
# Small helpers.
# ----------------------------------------------------------------------------
def _cdiv(a, b):
    return -(-a // b)


def _round8(x):
    return _cdiv(x, 8) * 8


def _tile_plan(t_out, rows_per_block, target_rows=512):
    """Split t_out output rows into n_t tiles of t_blk rows (t_blk % 8 == 0)."""
    t_cap = max(8, (target_rows // max(1, rows_per_block)) // 8 * 8)
    n_t = max(1, _cdiv(t_out, t_cap))
    t_blk = _round8(_cdiv(t_out, n_t))
    return n_t, t_blk, n_t * t_blk


def _fold_time(x, valid_len, stride, padding, t_rows_needed):
    """Zero-pad time and fold the stride phases into channels (channel-major).

    x: (N, T>=valid_len, C) -> (N, t_rows >= t_rows_needed, stride*C),
    folded channel index = c*stride + r  (keeps each conv group contiguous).
    """
    n, _, c = x.shape
    x = x[:, :valid_len, :].astype(_COMPUTE_DTYPE)
    l_target = max(valid_len + 2 * padding, t_rows_needed * stride)
    l_target = _cdiv(l_target, stride) * stride
    xp = jnp.pad(x, ((0, 0), (padding, l_target - valid_len - padding), (0, 0)))
    if stride == 1:
        return xp
    t_rows = l_target // stride
    xf = xp.reshape(n, t_rows, stride, c)
    xf = jnp.swapaxes(xf, 2, 3)
    return xf.reshape(n, t_rows, stride * c)


def _choose_cout_tile(cout):
    if cout <= 512:
        return cout
    for tile in (512, 256, 128):
        if cout % tile == 0:
            return tile
    return cout


def _choose_pack(groups, cin_g, cout_g, stride):
    """How many groups to pack block-diagonally per MXU tile (~256 out lanes)."""
    cout = groups * cout_g
    if cout <= 256:
        return groups
    upper = min(groups, max(1, 256 // max(1, cout_g)))
    for pack in range(upper, 0, -1):
        if groups % pack:
            continue
        if (pack * cout_g) % 128:
            continue
        if (pack * stride * cin_g) % 128:
            continue
        return pack
    return groups


def _pack_weight(w, b, stride, groups):
    """w: (k, cin_g, cout) -> (n_sg, ksq, k_w, cout_sg) supergroup-packed weights
    (block-diagonal across the groups packed into one supergroup), matching the
    channel-major folded input ordering."""
    k, cin_g, cout = w.shape
    cout_g = cout // groups
    ksq = _cdiv(k, stride)
    kg = stride * cin_g
    wp = jnp.pad(w.astype(jnp.float32), ((0, ksq * stride - k), (0, 0), (0, 0)))
    wp = wp.reshape(ksq, stride, cin_g, groups, cout_g)
    # (g, q, ci, r, co) -> row index ci*stride + r  (matches folded input)
    wg = wp.transpose(3, 0, 2, 1, 4).reshape(groups, ksq, kg, cout_g)
    if groups == 1:
        cout_sg = _choose_cout_tile(cout)
        n_sg = cout // cout_sg
        wsg = wg.reshape(ksq, kg, n_sg, cout_sg).transpose(2, 0, 1, 3)
        k_w = kg
    else:
        pack = _choose_pack(groups, cin_g, cout_g, stride)
        n_sg = groups // pack
        wgr = wg.reshape(n_sg, pack, ksq, kg, cout_g)
        eye = jnp.eye(pack, dtype=wg.dtype)
        wsg = jnp.einsum('spqkc,pr->sqpkrc', wgr, eye)
        wsg = wsg.reshape(n_sg, ksq, pack * kg, pack * cout_g)
        k_w = pack * kg
        cout_sg = pack * cout_g
    bsg = b.astype(jnp.float32).reshape(n_sg, 1, cout_sg)
    return wsg, bsg, n_sg, k_w, cout_sg


def _crop(x, valid):
    return x if x.shape[1] == valid else x[:, :valid, :]


# ----------------------------------------------------------------------------
# Pallas conv kernel: stride-1 conv over the folded input, one supergroup and
# one time tile per grid step.  Single f32 accumulator, bias + LeakyReLU fused.
# ----------------------------------------------------------------------------
def _conv_kernel(x_ref, w_ref, b_ref, o_ref, *, ksq, t_blk, neg_slope, apply_act):
    jt = pl.program_id(2)
    t0 = pl.multiple_of(jt * t_blk, 8)
    rows, _, cout_blk = o_ref.shape
    k_w = w_ref.shape[2]
    m = rows * t_blk

    acc = jnp.zeros((m, cout_blk), jnp.float32)
    for q in range(ksq):
        xs = x_ref[:, pl.ds(t0 + q, t_blk), :].reshape(m, k_w)
        acc = acc + jnp.dot(xs, w_ref[0, q], preferred_element_type=jnp.float32)
    acc = acc + b_ref[0]                      # (1, cout_blk) broadcast
    if apply_act:
        acc = jnp.where(acc >= 0.0, acc, neg_slope * acc)
    o_ref[...] = acc.reshape(rows, t_blk, cout_blk).astype(o_ref.dtype)


def conv1d_pallas(x, valid_len, w, b, *, stride=1, padding=0, groups=1,
                  apply_act=False, negative_slope=0.1, rows_per_block=1):
    """Channels-last conv1d (+ fused bias / LeakyReLU).

    x: (N, T>=valid_len, Cin), w: (K, Cin//groups, Cout), b: (Cout,)
    Returns (y_pad, t_out) with y_pad: (N, t_out_pad >= t_out, Cout) float32.
    """
    n, _, cin = x.shape
    ksize, cin_g, cout = w.shape
    assert cin_g * groups == cin and cout % groups == 0
    assert n % rows_per_block == 0
    t_out = (valid_len + 2 * padding - ksize) // stride + 1
    assert t_out >= 1, (valid_len, ksize, stride, padding)

    ksq = _cdiv(ksize, stride)
    wsg, bsg, n_sg, k_w, cout_sg = _pack_weight(w, b, stride, groups)
    n_t, t_blk, t_out_pad = _tile_plan(t_out, rows_per_block)

    xf = _fold_time(x, valid_len, stride, padding, t_out_pad + ksq - 1)

    # Tiny-cin layers: fold the taps into the contraction too -> one MXU dot.
    fold_taps = (groups == 1) and (stride * cin <= 8) and (n_sg == 1)
    if fold_taps and ksq > 1:
        xf = jnp.concatenate([xf[:, q:q + t_out_pad, :] for q in range(ksq)],
                             axis=-1)
        wsg = wsg.reshape(n_sg, 1, ksq * k_w, cout_sg)
        k_w = ksq * k_w
        ksq_k = 1
    else:
        ksq_k = ksq

    xf = xf.astype(_COMPUTE_DTYPE)
    wsg = wsg.astype(_COMPUTE_DTYPE)
    t_rows = xf.shape[1]
    c_f_total = xf.shape[2]

    if groups > 1 and n_sg > 1:
        in_c_blk = k_w                              # channel-blocked by supergroup
        in_map = lambda i, sg, jt: (i, 0, sg)
    else:
        in_c_blk = c_f_total                        # resident across sg & time tiles
        in_map = lambda i, sg, jt: (i, 0, 0)

    kern = functools.partial(_conv_kernel, ksq=ksq_k, t_blk=t_blk,
                             neg_slope=negative_slope, apply_act=apply_act)
    rpb = rows_per_block
    out = pl.pallas_call(
        kern,
        out_shape=jax.ShapeDtypeStruct((n, t_out_pad, cout), jnp.float32),
        grid_spec=pltpu.PrefetchScalarGridSpec(
            num_scalar_prefetch=0,
            grid=(n // rpb, n_sg, n_t),
            in_specs=[
                pl.BlockSpec((rpb, t_rows, in_c_blk), in_map),
                pl.BlockSpec((1, ksq_k, k_w, cout_sg),
                             lambda i, sg, jt: (sg, 0, 0, 0)),
                pl.BlockSpec((1, 1, cout_sg), lambda i, sg, jt: (sg, 0, 0)),
            ],
            out_specs=pl.BlockSpec((rpb, t_blk, cout_sg),
                                   lambda i, sg, jt: (i, jt, sg)),
        ),
        compiler_params=pltpu.CompilerParams(
            dimension_semantics=("parallel", "arbitrary", "arbitrary"),
            vmem_limit_bytes=_VMEM_LIMIT),
        cost_estimate=pl.CostEstimate(
            flops=2 * n * t_out * ksize * cin_g * cout,
            transcendentals=0,
            bytes_accessed=4 * (int(xf.size) + int(wsg.size)
                                + int(n * t_out_pad * cout))),
    )(xf, wsg, bsg)
    return out, t_out


# ----------------------------------------------------------------------------
# AvgPool1d on the raw (c==1) waveform: plain XLA (too small to be worth a
# Pallas launch).  count_include_pad=True, channels-last.
# ----------------------------------------------------------------------------
def avgpool1d_jnp(x, kernel_size, stride, padding=0):
    n, t, c = x.shape
    t_out = (t + 2 * padding - kernel_size) // stride + 1
    xp = jnp.pad(x, ((0, 0), (padding, padding), (0, 0)))
    limit = (t_out - 1) * stride + 1
    acc = lax.slice_in_dim(xp, 0, limit, stride=stride, axis=1)
    for i in range(1, kernel_size):
        acc = acc + lax.slice_in_dim(xp, i, i + limit, stride=stride, axis=1)
    return acc * (1.0 / kernel_size)


# ----------------------------------------------------------------------------
# Parameter init (torch Conv default init; weight_norm skipped — identity at init).
# ----------------------------------------------------------------------------
def _init_conv(key, k, cin, cout, groups=1):
    kw, kb = jax.random.split(key)
    cin_g = cin // groups
    lim = 1.0 / float(k * cin_g) ** 0.5
    w = jax.random.uniform(kw, (k, cin_g, cout), jnp.float32, -lim, lim)
    bias = jax.random.uniform(kb, (cout,), jnp.float32, -lim, lim)
    return {'w': w, 'b': bias}


# ----------------------------------------------------------------------------
# HiFiGAN period discriminator.
# ----------------------------------------------------------------------------
def init_period_discriminator(key, period, in_channels=1, out_channels=1,
                              kernel_sizes=(5, 3), channels=32,
                              downsample_scales=(3, 3, 3, 3, 1),
                              max_downsample_channels=1024):
    convs = []
    in_chs, out_chs = in_channels, channels
    for ds in downsample_scales:
        key, sub = jax.random.split(key)
        p = _init_conv(sub, kernel_sizes[0], in_chs, out_chs)
        p.update(stride=ds, pad=(kernel_sizes[0] - 1) // 2)
        convs.append(p)
        in_chs = out_chs
        out_chs = min(out_chs * 4, max_downsample_channels)
    assert out_chs == in_chs, "reference output_conv assumes channel cap reached"
    key, sub = jax.random.split(key)
    oc = _init_conv(sub, kernel_sizes[1] - 1, out_chs, out_channels)
    oc.update(stride=1, pad=(kernel_sizes[1] - 1) // 2)
    return {'period': period, 'convs': convs, 'output_conv': oc}


def period_discriminator_forward(params, x, negative_slope=0.1):
    b, c, t = x.shape
    period = params['period']
    if t % period != 0:
        n_pad = period - t % period
        assert n_pad < t, "reflect pad assumes n_pad < T"
        x = jnp.pad(x, ((0, 0), (0, 0), (0, n_pad)), mode='reflect')
        t = t + n_pad
    h = t // period
    # torch view (B,C,T)->(B,C,H,P); kernel layout (B*P, H, C); all P columns of
    # a batch element are packed into one block (matmul M = period*t_blk).
    xk = jnp.transpose(x.reshape(b, c, h, period), (0, 3, 2, 1))
    xk = xk.reshape(b * period, h, c).astype(jnp.float32)
    valid = h
    outs = []
    for layer in params['convs']:
        xk, valid = conv1d_pallas(xk, valid, layer['w'], layer['b'],
                                  stride=layer['stride'], padding=layer['pad'],
                                  groups=1, apply_act=True,
                                  negative_slope=negative_slope,
                                  rows_per_block=period)
        ch = xk.shape[2]
        outs.append(jnp.transpose(
            _crop(xk, valid).reshape(b, period, valid, ch), (0, 3, 2, 1)))
    oc = params['output_conv']
    xk, valid = conv1d_pallas(xk, valid, oc['w'], oc['b'], stride=1,
                              padding=oc['pad'], groups=1, apply_act=False,
                              rows_per_block=period)
    ch = xk.shape[2]
    xt = jnp.transpose(_crop(xk, valid).reshape(b, period, valid, ch),
                       (0, 3, 2, 1))              # (B, Cout, H', P)
    outs.append(xt.reshape(b, -1))                # torch.flatten(x, 1, -1)
    return outs


# ----------------------------------------------------------------------------
# HiFiGAN scale discriminator.
# ----------------------------------------------------------------------------
def init_scale_discriminator(key, scale, in_channels=1, out_channels=1,
                             kernel_sizes=(15, 41, 5, 3), channels=128,
                             max_downsample_channels=1024, max_groups=16,
                             downsample_scales=(2, 2, 4, 4, 1)):
    layers = []
    if scale != 1:
        layers.append({'type': 'pool', 'k': scale, 'stride': scale, 'pad': 0})
    key, sub = jax.random.split(key)
    p = _init_conv(sub, kernel_sizes[0], in_channels, channels)
    p.update(type='conv', stride=1, pad=(kernel_sizes[0] - 1) // 2,
             groups=1, act=True)
    layers.append(p)
    in_chs, out_chs, groups = channels, channels, 4
    for ds in downsample_scales:
        key, sub = jax.random.split(key)
        p = _init_conv(sub, kernel_sizes[1], in_chs, out_chs, groups=groups)
        p.update(type='conv', stride=ds, pad=(kernel_sizes[1] - 1) // 2,
                 groups=groups, act=True)
        layers.append(p)
        in_chs = out_chs
        out_chs = min(in_chs * 2, max_downsample_channels)
        groups = min(groups * 4, max_groups)
    out_chs = min(in_chs * 2, max_downsample_channels)
    key, sub = jax.random.split(key)
    p = _init_conv(sub, kernel_sizes[2], in_chs, out_chs)
    p.update(type='conv', stride=1, pad=(kernel_sizes[2] - 1) // 2,
             groups=1, act=True)
    layers.append(p)
    key, sub = jax.random.split(key)
    p = _init_conv(sub, kernel_sizes[3], out_chs, out_channels)
    p.update(type='conv', stride=1, pad=(kernel_sizes[3] - 1) // 2,
             groups=1, act=False)
    layers.append(p)
    return {'layers': layers}


def scale_discriminator_forward(params, x, negative_slope=0.1):
    xk = jnp.transpose(x, (0, 2, 1)).astype(jnp.float32)   # channels-last chain
    valid = xk.shape[1]
    outs = []
    for layer in params['layers']:
        if layer['type'] == 'pool':
            xk = avgpool1d_jnp(_crop(xk, valid), layer['k'], layer['stride'],
                               layer['pad'])
            valid = xk.shape[1]
        else:
            xk, valid = conv1d_pallas(xk, valid, layer['w'], layer['b'],
                                      stride=layer['stride'],
                                      padding=layer['pad'],
                                      groups=layer['groups'],
                                      apply_act=layer['act'],
                                      negative_slope=negative_slope,
                                      rows_per_block=1)
        outs.append(jnp.transpose(_crop(xk, valid), (0, 2, 1)))  # torch (B,C,T)
    return outs


# ----------------------------------------------------------------------------
# Multi-scale / multi-period / combined modules.
# ----------------------------------------------------------------------------
def init_multi_scale_discriminator(key, scales, scale_params):
    discs = []
    for i in range(scales):
        key, sub = jax.random.split(key)
        discs.append(init_scale_discriminator(sub, scale=2 ** i, **scale_params))
    return {'discriminators': discs, 'pool': {'k': 4, 'stride': 2, 'pad': 2}}


def multi_scale_forward(params, x):
    outs = []
    discs = params['discriminators']
    pool = params['pool']
    for i, d in enumerate(discs):
        outs.append(scale_discriminator_forward(d, x))
        if i + 1 < len(discs):   # reference also pools after last disc (no effect)
            xk = jnp.transpose(x, (0, 2, 1))
            xk = avgpool1d_jnp(xk, pool['k'], pool['stride'], pool['pad'])
            x = jnp.transpose(xk, (0, 2, 1))
    return outs


def init_multi_period_discriminator(key, periods, period_params):
    discs = []
    for p in periods:
        key, sub = jax.random.split(key)
        discs.append(init_period_discriminator(sub, period=p, **period_params))
    return {'discriminators': discs}


def multi_period_forward(params, x):
    return [period_discriminator_forward(d, x)
            for d in params['discriminators']]


def init_ms_mp_discriminator(key, scales, scale_params, periods, period_params):
    k1, k2 = jax.random.split(key)
    return {'msd': init_multi_scale_discriminator(k1, scales, scale_params),
            'mpd': init_multi_period_discriminator(k2, periods, period_params)}


def hifigan_ms_mp_forward(params, x):
    """x: (B, 1, T) -> list of lists of per-layer outputs (MSD then MPD)."""
    return multi_scale_forward(params['msd'], x) + \
           multi_period_forward(params['mpd'], x)


# ----------------------------------------------------------------------------
if __name__ == "__main__":
    B, T = 2, 256
    x = jax.random.normal(jax.random.PRNGKey(0), (B, 1, T), jnp.float32)

    # Reduced channel counts (same architecture / topology) so the demo is small.
    scale_params = dict(in_channels=1, out_channels=1,
                        kernel_sizes=(15, 41, 5, 3), channels=32,
                        max_downsample_channels=128, max_groups=16,
                        downsample_scales=(2, 2, 4, 4, 1))
    period_params = dict(in_channels=1, out_channels=1, kernel_sizes=(5, 3),
                         channels=32, downsample_scales=(3, 3, 3, 3, 1),
                         max_downsample_channels=128)

    params = init_ms_mp_discriminator(jax.random.PRNGKey(42),
                                      scales=3, scale_params=scale_params,
                                      periods=(2, 3, 5, 7, 11),
                                      period_params=period_params)

    outs = hifigan_ms_mp_forward(params, x)
    jax.block_until_ready(outs)
    print("KERNEL_OK")
</pallas_src>

<mosaic_0001>
module attributes {stable_mosaic.version = 11 : i64} {
  func.func @_conv_kernel(%arg0: i32, %arg1: i32, %arg2: i32, %arg3: memref<1x256x15xf32, #tpu.memory_space<vmem>>, %arg4: memref<1x1x15x32xf32, #tpu.memory_space<vmem>>, %arg5: memref<1x1x32xf32, #tpu.memory_space<vmem>>, %arg6: memref<1x256x32xf32, #tpu.memory_space<vmem>>) attributes {dimension_semantics = [#tpu.dimension_semantics<parallel>, #tpu.dimension_semantics<arbitrary>, #tpu.dimension_semantics<arbitrary>], iteration_bounds = array<i64: 2, 1, 1>, scalar_prefetch = 0 : i64, scratch_operands = 0 : i64, tpu.core_type = #tpu.core_type<tc>, window_params = [{transform_indices = @transform_0, window_bounds = array<i64: 1, 256, 15>}, {transform_indices = @transform_1, window_bounds = array<i64: 1, 1, 15, 32>}, {transform_indices = @transform_2, window_bounds = array<i64: 1, 1, 32>}, {transform_indices = @transform_3, window_bounds = array<i64: 1, 256, 32>}]} {
    %c256_i32 = arith.constant 256 : i32
    %0 = arith.muli %arg2, %c256_i32 : i32
    %1 = tpu.assume_multiple %0, 8 : i32
    %cst = arith.constant 0.000000e+00 : f32
    %2 = vector.broadcast %cst : f32 to vector<256x32xf32>
    %c0_i32 = arith.constant 0 : i32
    %3 = arith.addi %1, %c0_i32 : i32
    %c0 = arith.constant 0 : index
    %4 = arith.index_cast %3 : i32 to index
    %c0_0 = arith.constant 0 : index
    %5 = vector.load %arg3[%c0, %4, %c0_0] : memref<1x256x15xf32, #tpu.memory_space<vmem>>, vector<1x256x15xf32>
    %6 = vector.shape_cast %5 : vector<1x256x15xf32> to vector<256x15xf32>
    %c0_1 = arith.constant 0 : index
    %c0_2 = arith.constant 0 : index
    %c0_3 = arith.constant 0 : index
    %c0_4 = arith.constant 0 : index
    %7 = vector.load %arg4[%c0_1, %c0_2, %c0_3, %c0_4] : memref<1x1x15x32xf32, #tpu.memory_space<vmem>>, vector<1x1x15x32xf32>
    %8 = vector.shape_cast %7 : vector<1x1x15x32xf32> to vector<15x32xf32>
    %cst_5 = arith.constant dense<0.000000e+00> : vector<256x32xf32>
    %9 = tpu.matmul %6, %8, %cst_5 {dimension_numbers = #tpu.dot_dimension_numbers<[1], [0], [0], [1], [0, 0, 1, 1], [], []>} : vector<256x15xf32>, vector<15x32xf32>, vector<256x32xf32> -> vector<256x32xf32>
    %10 = arith.addf %2, %9 : vector<256x32xf32>
    %c0_6 = arith.constant 0 : index
    %c0_7 = arith.constant 0 : index
    %c0_8 = arith.constant 0 : index
    %11 = vector.load %arg5[%c0_6, %c0_7, %c0_8] : memref<1x1x32xf32, #tpu.memory_space<vmem>>, vector<1x1x32xf32>
    %12 = vector.shape_cast %11 : vector<1x1x32xf32> to vector<1x32xf32>
    %13 = vector.broadcast %12 : vector<1x32xf32> to vector<256x32xf32>
    %14 = arith.addf %10, %13 : vector<256x32xf32>
    %cst_9 = arith.constant 0.000000e+00 : f32
    %15 = vector.broadcast %cst_9 : f32 to vector<256x32xf32>
    %16 = arith.cmpf oge, %14, %15 : vector<256x32xf32>
    %cst_10 = arith.constant 1.000000e-01 : f32
    %17 = vector.broadcast %cst_10 : f32 to vector<256x32xf32>
    %18 = arith.mulf %17, %14 : vector<256x32xf32>
    %19 = arith.select %16, %14, %18 : vector<256x32xi1>, vector<256x32xf32>
    %20 = vector.shape_cast %19 : vector<256x32xf32> to vector<1x256x32xf32>
    %c0_11 = arith.constant 0 : index
    %c0_12 = arith.constant 0 : index
    %c0_13 = arith.constant 0 : index
    %21 = vector.load %arg6[%c0_11, %c0_12, %c0_13] : memref<1x256x32xf32, #tpu.memory_space<vmem>>, vector<1x256x32xf32>
    tpu.vector_store %arg6[%c0_11, %c0_12, %c0_13], %20 {strides = array<i32>} : memref<1x256x32xf32, #tpu.memory_space<vmem>>, vector<1x256x32xf32>,
    return
  }
  func.func @transform_0(%arg0: i32, %arg1: i32, %arg2: i32) -> (i32, i32, i32) {
    %c0_i32 = arith.constant 0 : i32
    %c0_i32_0 = arith.constant 0 : i32
    %c0_i32_1 = arith.constant 0 : i32
    return %arg0, %c0_i32, %c0_i32_0 : i32, i32, i32
  }
  func.func @transform_1(%arg0: i32, %arg1: i32, %arg2: i32) -> (i32, i32, i32, i32) {
    %c0_i32 = arith.constant 0 : i32
    %c0_i32_0 = arith.constant 0 : i32
    %c0_i32_1 = arith.constant 0 : i32
    %c0_i32_2 = arith.constant 0 : i32
    return %arg1, %c0_i32, %c0_i32_0, %c0_i32_1 : i32, i32, i32, i32
  }
  func.func @transform_2(%arg0: i32, %arg1: i32, %arg2: i32) -> (i32, i32, i32) {
    %c0_i32 = arith.constant 0 : i32
    %c0_i32_0 = arith.constant 0 : i32
    %c0_i32_1 = arith.constant 0 : i32
    return %arg1, %c0_i32, %c0_i32_0 : i32, i32, i32
  }
  func.func @transform_3(%arg0: i32, %arg1: i32, %arg2: i32) -> (i32, i32, i32) {
    %c0_i32 = arith.constant 0 : i32
    return %arg0, %arg2, %arg1 : i32, i32, i32
  }
}

</mosaic_0001>

<llo_original>
// kernel: tpu_custom_call.1
$region0: #{tpu_custom_call.1}
  #allocation0 [shape = 'u32[]', space=smem, size = 0x4, offset = 0x4, fixed_abs, tag = 'smem constant byte address 0x4 - core index']
  #allocation1 [shape = 'u32[144,128]{1,0:T(1,128)}', space=vmem, size = 0x12000, scoped, tag = 'internal scratch']
  %s0 = inlined_call_operand.vmem [shape: f32[2,256,15], index: 0, kind: input, shape index: {}]
  %s1 = inlined_call_operand.vmem [shape: f32[1,1,15,32], index: 1, kind: input, shape index: {}]
  %s2 = inlined_call_operand.vmem [shape: f32[1,1,32], index: 2, kind: input, shape index: {}]
  %s3 = inlined_call_operand.vmem [shape: f32[2,256,32], index: 3, kind: output, shape index: {}]
  %s4 = sld [smem:[#allocation0]]
  $region45: #{tpu_custom_call.1} parent=0
    _
  %s6 = ssub.s32 1, %s4
  %s7 = scalar_select 0, %s6, %s4
  loop: start=0, step=1, limit=4
  $region2: #{tpu_custom_call.1} parent=0 // loop_pre_header
    _
  $region3: #{tpu_custom_call.1} parent=0 // loop_header
    %s9 = sphi 0, %s13
    %p10 = scmp.ge.s32.totalorder %s9, 4
    %s16 = sphi 0, %s35
    %s17 = sphi 0, %s31
    %s18 = sphi 0, %s27
    %s19 = sphi 0, %s16
    %s20 = sphi 0, %s17
    %s21 = sphi 0, %s18
    %s22 = sphi 0, %s19
    %s23 = sphi 0, %s20
    %s24 = sphi 0, %s21
    %s38 = sphi 0, %s40
    %s41 = sphi 0, %s38
    %s42 = sphi 0, %s41
    %s58 = sphi 0, %s42
    %s64 = sphi 0, %s66
    %s67 = sphi 0, %s64
    %s68 = sphi 0, %s67
    %s84 = sphi 0, %s68
    %s90 = sphi 0, %s92
    %s93 = sphi 0, %s90
    %s94 = sphi 0, %s93
    %s110 = sphi 0, %s94
    %s120 = sphi 0, %s122
    %s123 = sphi 0, %s120
    %s124 = sphi 0, %s123
    %s140 = sphi 0, %s124
  $region4: #{tpu_custom_call.1} parent=0 // loop_header_branch
    %12 = sbr.rel (%p10) target = $region8
  $region5: #{tpu_custom_call.1} parent=0 // loop_body
    %s14 = ssub.s32 %s9, 1
    %s15 = ssub.s32 %s9, 2
    %s25 = sadd.s32 1, %s18
    %p26 = scmp.ge.s32.totalorder %s25, 1
    %s27 = scalar_select %p26, 0, %s25
    %s28 = sadd.s32 1, %s17
    %s29 = scalar_select %p26, %s28, %s17
    %p30 = scmp.ge.s32.totalorder %s29, 1
    %s31 = scalar_select %p30, 0, %s29
    %s32 = sadd.s32 1, %s16
    %s33 = scalar_select %p30, %s32, %s16
    %p34 = scmp.ge.s32.totalorder %s33, 2
    %s35 = scalar_select %p34, 0, %s33
    %s36 = ssub.s32 %s16, %s35
    %p37 = scmp.eq.s32.totalorder %s36, 0
    %s39 = sadd.s32 %s38, 1
    %s40 = scalar_select %p37, %s38, %s39
    %p43 = pneg %p37
    %p44 = scmp.eq.s32.totalorder %s9, 1
    %p45 = por %p43, %p44
    %p46 = scmp.ne.s32.totalorder %s38, %s41
    %p47 = scmp.eq.s32.totalorder %s9, 0
    %p48 = por %p46, %p47
    %p49 = scmp.ne.s32.totalorder %s38, %s41
    %p50 = scmp.eq.s32.totalorder %s14, 1
    %p51 = por %p49, %p50
    %p52 = scmp.ne.s32.totalorder %s41, %s42
    %p53 = scmp.eq.s32.totalorder %s14, 0
    %p54 = por %p52, %p53
    %p55 = scmp.ne.s32.totalorder %s41, %s42
    %p56 = scmp.eq.s32.totalorder %s15, 1
    %p57 = por %p55, %p56
    %p59 = scmp.ne.s32.totalorder %s42, %s58
    %p60 = scmp.eq.s32.totalorder %s15, 0
    %p61 = por %p59, %p60
    %s62 = ssub.s32 %s17, %s31
    %p63 = scmp.eq.s32.totalorder %s62, 0
    %s65 = sadd.s32 %s64, 1
    %s66 = scalar_select %p63, %s64, %s65
    %p69 = pneg %p63
    %p70 = scmp.eq.s32.totalorder %s9, 1
    %p71 = por %p69, %p70
    %p72 = scmp.ne.s32.totalorder %s64, %s67
    %p73 = scmp.eq.s32.totalorder %s9, 0
    %p74 = por %p72, %p73
    %p75 = scmp.ne.s32.totalorder %s64, %s67
    %p76 = scmp.eq.s32.totalorder %s14, 1
    %p77 = por %p75, %p76
    %p78 = scmp.ne.s32.totalorder %s67, %s68
    %p79 = scmp.eq.s32.totalorder %s14, 0
    %p80 = por %p78, %p79
    %p81 = scmp.ne.s32.totalorder %s67, %s68
    %p82 = scmp.eq.s32.totalorder %s15, 1
    %p83 = por %p81, %p82
    %p85 = scmp.ne.s32.totalorder %s68, %s84
    %p86 = scmp.eq.s32.totalorder %s15, 0
    %p87 = por %p85, %p86
    %s88 = ssub.s32 %s17, %s31
    %p89 = scmp.eq.s32.totalorder %s88, 0
    %s91 = sadd.s32 %s90, 1
    %s92 = scalar_select %p89, %s90, %s91
    %p95 = pneg %p89
    %p96 = scmp.eq.s32.totalorder %s9, 1
    %p97 = por %p95, %p96
    %p98 = scmp.ne.s32.totalorder %s90, %s93
    %p99 = scmp.eq.s32.totalorder %s9, 0
    %p100 = por %p98, %p99
    %p101 = scmp.ne.s32.totalorder %s90, %s93
    %p102 = scmp.eq.s32.totalorder %s14, 1
    %p103 = por %p101, %p102
    %p104 = scmp.ne.s32.totalorder %s93, %s94
    %p105 = scmp.eq.s32.totalorder %s14, 0
    %p106 = por %p104, %p105
    %p107 = scmp.ne.s32.totalorder %s93, %s94
    %p108 = scmp.eq.s32.totalorder %s15, 1
    %p109 = por %p107, %p108
    %p111 = scmp.ne.s32.totalorder %s94, %s110
    %p112 = scmp.eq.s32.totalorder %s15, 0
    %p113 = por %p111, %p112
    %s114 = ssub.s32 %s16, %s35
    %s115 = ssub.s32 %s18, %s27
    %s116 = sor.u32 %s114, %s115
    %s117 = ssub.s32 %s17, %s31
    %s118 = sor.u32 %s116, %s117
    %p119 = scmp.eq.s32.totalorder %s118, 0
    %s121 = sadd.s32 %s120, 1
    %s122 = scalar_select %p119, %s120, %s121
    %p125 = pneg %p119
    %p126 = scmp.eq.s32.totalorder %s9, 1
    %p127 = por %p125, %p126
    %p128 = scmp.ne.s32.totalorder %s120, %s123
    %p129 = scmp.eq.s32.totalorder %s9, 0
    %p130 = por %p128, %p129
    %p131 = scmp.ne.s32.totalorder %s120, %s123
    %p132 = scmp.eq.s32.totalorder %s14, 1
    %p133 = por %p131, %p132
    %p134 = scmp.ne.s32.totalorder %s123, %s124
    %p135 = scmp.eq.s32.totalorder %s14, 0
    %p136 = por %p134, %p135
    %p137 = scmp.ne.s32.totalorder %s123, %s124
    %p138 = scmp.eq.s32.totalorder %s15, 1
    %p139 = por %p137, %p138
    %p141 = scmp.ne.s32.totalorder %s124, %s140
    %p142 = scmp.eq.s32.totalorder %s15, 0
    %p143 = por %p141, %p142
    %p144 = scmp.le.s32.totalorder 1, %s9
    %p145 = scmp.lt.s32.totalorder %s9, 3
    %p146 = pnand %p144, %p145
    %p147 = pneg %p146
    // Predicated region
    $region9: #{tpu_custom_call.1} parent=5 // pred_check
      _
    $region10: #{tpu_custom_call.1} parent=5 // pred_check_branch
      %149 = sbr.rel (%p146) target = $region12
    $region11: #{tpu_custom_call.1} parent=5 // pred_region
      %s150 = ssub.s32 %s9, 1
      // Predicated region
      $region13: #{tpu_custom_call.1} parent=11 // pred_check
        %p151 = pneg %p80
      $region14: #{tpu_custom_call.1} parent=11 // pred_check_branch
        %153 = sbr.rel (%p151) target = $region16
      $region15: #{tpu_custom_call.1} parent=11 // pred_region
        %p154 = scmp.lt.s32.totalorder %s20, 0
        %s155 = scalar_select %p154, %s20, 0
        %s156 = smul.addr %s155, 2
        %s157 = smul.addr %s156, 8
        %s158 = scalar_lea.vmem %s1, %s157
      $region16: #{tpu_custom_call.1} parent=11 // pred_fallthru
        _
      // Predicated region
      $region17: #{tpu_custom_call.1} parent=11 // pred_check
        %p159 = pneg %p106
      $region18: #{tpu_custom_call.1} parent=11 // pred_check_branch
        %161 = sbr.rel (%p159) target = $region20
      $region19: #{tpu_custom_call.1} parent=11 // pred_region
        %p162 = scmp.lt.s32.totalorder %s20, 0
        %s163 = scalar_select %p162, %s20, 0
        %s164 = scalar_lea.vmem %s2, %s163
      $region20: #{tpu_custom_call.1} parent=11 // pred_fallthru
        _
    $region12: #{tpu_custom_call.1} parent=5 // pred_fallthru
      _
    %p165 = scmp.lt.s32.totalorder %s9, 2
    // Predicated region
    $region21: #{tpu_custom_call.1} parent=5 // pred_check
      %p166 = pneg %p165
    $region22: #{tpu_custom_call.1} parent=5 // pred_check_branch
      %168 = sbr.rel (%p166) target = $region24
    $region23: #{tpu_custom_call.1} parent=5 // pred_region
      // Predicated region
      $region25: #{tpu_custom_call.1} parent=23 // pred_check
        %p169 = pneg %p48
      $region26: #{tpu_custom_call.1} parent=23 // pred_check_branch
        %171 = sbr.rel (%p169) target = $region28
      $region27: #{tpu_custom_call.1} parent=23 // pred_region
        %p172 = scmp.lt.s32.totalorder %s16, 1
        %s173 = scalar_select %p172, %s16, 1
        %s174 = smul.addr %s173, 32
        %s175 = smul.addr %s174, 8
        %s176 = scalar_lea.vmem %s0, %s175
      $region28: #{tpu_custom_call.1} parent=23 // pred_fallthru
        _
    $region24: #{tpu_custom_call.1} parent=5 // pred_fallthru
      _
    %p177 = scmp.le.s32.totalorder 1, %s9
    %p178 = scmp.lt.s32.totalorder %s9, 3
    %p179 = pnand %p177, %p178
    %p180 = pneg %p179
    // Predicated region
    $region29: #{tpu_custom_call.1} parent=5 // pred_check
      _
    $region30: #{tpu_custom_call.1} parent=5 // pred_check_branch
      %182 = sbr.rel (%p179) target = $region32
    $region31: #{tpu_custom_call.1} parent=5 // pred_region
      %s183 = ssub.s32 %s9, 1
      %p184 = scmp.lt.s32.totalorder %s19, 1
      %s185 = scalar_select %p184, %s19, 1
      %s186 = smul.addr %s185, 32
      %s187 = smul.addr %s186, 8
      %s188 = scalar_lea.vmem %s0, %s187
      %p189 = pneg %p54
      %p190 = pneg %p51
      %p191 = scmp.lt.s32.totalorder %s20, 0
      %s192 = scalar_select %p191, %s20, 0
      %s193 = smul.addr %s192, 2
      %s194 = smul.addr %s193, 8
      %s195 = scalar_lea.vmem %s1, %s194
      %p196 = pneg %p80
      %p197 = pneg %p77
      %p198 = scmp.lt.s32.totalorder %s20, 0
      %s199 = scalar_select %p198, %s20, 0
      %s200 = scalar_lea.vmem %s2, %s199
      %p201 = pneg %p106
      %p202 = pneg %p103
      %p203 = pneg %p136
      %p204 = pneg %p133
      %s205 = smul.u32 32, %s21
      %p206 = scmp.lt.s32.totalorder %s19, 1
      %s207 = scalar_select %p206, %s19, 1
      %p208 = scmp.lt.s32.totalorder %s205, 31
      %s209 = scalar_select %p208, %s205, 31
      %p210 = scmp.lt.s32.totalorder %s20, 0
      %s211 = scalar_select %p210, %s20, 0
      %s212 = sadd.s32 %s211, %s209
      %s213 = smul.addr %s207, 32
      %s214 = sadd.s32 %s212, %s213
      %s215 = smul.addr %s214, 8
      %s216 = scalar_lea.vmem %s3, %s215
      %p217 = scmp.lt.s32.totalorder %s19, 1
      %s218 = scalar_select %p217, %s19, 1
      %s219 = smul.addr %s218, 32
      %s220 = smul.addr %s219, 8
      %s221 = scalar_lea.vmem %s0, %s220
      %p222 = scmp.lt.s32.totalorder %s20, 0
      %s223 = scalar_select %p222, %s20, 0
      %s224 = smul.addr %s223, 2
      %s225 = smul.addr %s224, 8
      %s226 = scalar_lea.vmem %s1, %s225
      %p227 = scmp.lt.s32.totalorder %s20, 0
      %s228 = scalar_select %p227, %s20, 0
      %s229 = scalar_lea.vmem %s2, %s228
      %s230 = smul.u32 32, %s21
      %p231 = scmp.lt.s32.totalorder %s19, 1
      %s232 = scalar_select %p231, %s19, 1
      %p233 = scmp.lt.s32.totalorder %s230, 31
      %s234 = scalar_select %p233, %s230, 31
      %p235 = scmp.lt.s32.totalorder %s20, 0
      %s236 = scalar_select %p235, %s20, 0
      %s237 = sadd.s32 %s236, %s234
      %s238 = smul.addr %s232, 32
      %s239 = sadd.s32 %s237, %s238
      %s240 = smul.addr %s239, 8
      %s241 = scalar_lea.vmem %s3, %s240
      %s242 = smul.u32 32, %s21
      %s243 = smul.u32 %s21, 256
      %s244 = scalar_lea.vmem %s221, %s243
      %v245 = vld [vmem:[%s244] sm:$0xff]
      %v246 = vld [vmem:[%s244 + $0x8] sm:$0xff]
      %v247 = vld [vmem:[%s244 + $0x10] sm:$0xff]
      %v248 = vld [vmem:[%s244 + $0x18] sm:$0xff]
      %v249 = vld [vmem:[%s244 + $0x20] sm:$0xff]
      %v250 = vld [vmem:[%s244 + $0x28] sm:$0xff]
      %v251 = vld [vmem:[%s244 + $0x30] sm:$0xff]
      %v252 = vld [vmem:[%s244 + $0x38] sm:$0xff]
      %v253 = vld [vmem:[%s244 + $0x40] sm:$0xff]
      %v254 = vld [vmem:[%s244 + $0x48] sm:$0xff]
      %v255 = vld [vmem:[%s244 + $0x50] sm:$0xff]
      %v256 = vld [vmem:[%s244 + $0x58] sm:$0xff]
      %v257 = vld [vmem:[%s244 + $0x60] sm:$0xff]
      %v258 = vld [vmem:[%s244 + $0x68] sm:$0xff]
      %v259 = vld [vmem:[%s244 + $0x70] sm:$0xff]
      %v260 = vld [vmem:[%s244 + $0x78] sm:$0xff]
      %v261 = vld [vmem:[%s244 + $0x80] sm:$0xff]
      %v262 = vld [vmem:[%s244 + $0x88] sm:$0xff]
      %v263 = vld [vmem:[%s244 + $0x90] sm:$0xff]
      %v264 = vld [vmem:[%s244 + $0x98] sm:$0xff]
      %v265 = vld [vmem:[%s244 + $0xa0] sm:$0xff]
      %v266 = vld [vmem:[%s244 + $0xa8] sm:$0xff]
      %v267 = vld [vmem:[%s244 + $0xb0] sm:$0xff]
      %v268 = vld [vmem:[%s244 + $0xb8] sm:$0xff]
      %v269 = vld [vmem:[%s244 + $0xc0] sm:$0xff]
      %v270 = vld [vmem:[%s244 + $0xc8] sm:$0xff]
      %v271 = vld [vmem:[%s244 + $0xd0] sm:$0xff]
      %v272 = vld [vmem:[%s244 + $0xd8] sm:$0xff]
      %v273 = vld [vmem:[%s244 + $0xe0] sm:$0xff]
      %v274 = vld [vmem:[%s244 + $0xe8] sm:$0xff]
      %v275 = vld [vmem:[%s244 + $0xf0] sm:$0xff]
      %v276 = vld [vmem:[%s244 + $0xf8] sm:$0xff]
      %v277 = vld [vmem:[%s226] sm:$0xff]
      %v278 = vld [vmem:[%s226 + $0x8] sm:$0x7f]
      %v279 = vld [vmem:[%s229] sm:$0x1]
      %v281 = vlaneseq
      %v282 = vshrl.u32 %v281, 7
      %v283 = vsub.s32 0, %v282
      %v284 = vrot.slane %v279, %v283
      %vm286 = vcmask 121856
      %v288 = vsel %vm286, %v245, 0
      %v291 = vsel %vm286, %v246, 0
      %v294 = vsel %vm286, %v247, 0
      %v297 = vsel %vm286, %v248, 0
      %v300 = vsel %vm286, %v249, 0
      %v303 = vsel %vm286, %v250, 0
      %v306 = vsel %vm286, %v251, 0
      %v309 = vsel %vm286, %v252, 0
      %v312 = vsel %vm286, %v253, 0
      %v315 = vsel %vm286, %v254, 0
      %v318 = vsel %vm286, %v255, 0
      %v321 = vsel %vm286, %v256, 0
      %v324 = vsel %vm286, %v257, 0
      %v327 = vsel %vm286, %v258, 0
      %v330 = vsel %vm286, %v259, 0
      %v333 = vsel %vm286, %v260, 0
      %v336 = vsel %vm286, %v261, 0
      %v339 = vsel %vm286, %v262, 0
      %v342 = vsel %vm286, %v263, 0
      %v345 = vsel %vm286, %v264, 0
      %v348 = vsel %vm286, %v265, 0
      %v351 = vsel %vm286, %v266, 0
      %v354 = vsel %vm286, %v267, 0
      %v357 = vsel %vm286, %v268, 0
      %v360 = vsel %vm286, %v269, 0
      %v363 = vsel %vm286, %v270, 0
      %v366 = vsel %vm286, %v271, 0
      %v369 = vsel %vm286, %v272, 0
      %v372 = vsel %vm286, %v273, 0
      %v375 = vsel %vm286, %v274, 0
      %v378 = vsel %vm286, %v275, 0
      %v381 = vsel %vm286, %v276, 0
      %vm383 = vcmask 1046528
      %v385 = vsel %vm383, %v278, 0
      %387 = vmatprep.subr.mxu0 0.0
      %388 = vmatpush1.msra.mxu0 %v277
      %389 = vmatprep.subr.mxu0 0.0
      %390 = vmatpush1.msra.mxu0 %v385
      %391 = vmatprep.subr.mxu0 0.0
      %392 = vmatpush1.msra.mxu0 0.0
      %393 = vmatprep.subr.mxu0 0.0
      %394 = vmatpush1.msra.mxu0 0.0
      %395 = vmatprep.subr.mxu0 0.0
      %396 = vmatpush1.msra.mxu0 0.0
      %397 = vmatprep.subr.mxu0 0.0
      %398 = vmatpush1.msra.mxu0 0.0
      %399 = vmatprep.subr.mxu0 0.0
      %400 = vmatpush1.msra.mxu0 0.0
      %401 = vmatprep.subr.mxu0 0.0
      %402 = vmatpush1.msra.mxu0 0.0
      %403 = vmatprep.subr.mxu0 0.0
      %404 = vmatpush1.msra.mxu0 0.0
      %405 = vmatprep.subr.mxu0 0.0
      %406 = vmatpush1.msra.mxu0 0.0
      %407 = vmatprep.subr.mxu0 0.0
      %408 = vmatpush1.msra.mxu0 0.0
      %409 = vmatprep.subr.mxu0 0.0
      %410 = vmatpush1.msra.mxu0 0.0
      %411 = vmatprep.subr.mxu0 0.0
      %412 = vmatpush1.msra.mxu0 0.0
      %413 = vmatprep.subr.mxu0 0.0
      %414 = vmatpush1.msra.mxu0 0.0
      %415 = vmatprep.subr.mxu0 0.0
      %416 = vmatpush1.msra.mxu0 0.0
      %417 = vmatprep.subr.mxu0 0.0
      %418 = vmatpush1.msra.mxu0 0.0
      %419 = vmatprep.subr.mxu0 0.0
      %420 = vmatpush1.msra.mxu0 0.0
      %421 = vmatprep.subr.mxu0 0.0
      %422 = vmatpush1.msra.mxu0 0.0
      %423 = vmatprep.subr.mxu0 0.0
      %424 = vmatpush1.msra.mxu0 0.0
      %425 = vmatprep.subr.mxu0 0.0
      %426 = vmatpush1.msra.mxu0 0.0
      %427 = vmatprep.subr.mxu0 0.0
      %428 = vmatpush1.msra.mxu0 0.0
      %429 = vmatprep.subr.mxu0 0.0
      %430 = vmatpush1.msra.mxu0 0.0
      %431 = vmatprep.subr.mxu0 0.0
      %432 = vmatpush1.msra.mxu0 0.0
      %433 = vmatprep.subr.mxu0 0.0
      %434 = vmatpush1.msra.mxu0 0.0
      %435 = vmatprep.subr.mxu0 0.0
      %436 = vmatpush1.msra.mxu0 0.0
      %437 = vmatprep.subr.mxu0 0.0
      %438 = vmatpush1.msra.mxu0 0.0
      %439 = vmatprep.subr.mxu0 0.0
      %440 = vmatpush1.msra.mxu0 0.0
      %441 = vmatprep.subr.mxu0 0.0
      %442 = vmatpush1.msra.mxu0 0.0
      %443 = vmatprep.subr.mxu0 0.0
      %444 = vmatpush1.msra.mxu0 0.0
      %445 = vmatprep.subr.mxu0 0.0
      %446 = vmatpush1.msra.mxu0 0.0
      %447 = vmatprep.subr.mxu0 0.0
      %448 = vmatpush1.msra.mxu0 0.0
      %449 = vmatprep.subr.mxu0 0.0
      %450 = vmatpush1.msra.mxu0 0.0
      %451 = vmatprep.mubr.f32.mxu0 0.0
      %452 = vmatmul.mubr.f32.gmra.mrb[0].mxu0 %v288
      %v453 = vpop.f32.mrb[0].mxu0
      %v454 = vadd.f32 %v284, %v453
      %v455 = vpop.f32.mrb[0].mxu0
      %456 = vmatprep.mubr.f32.mxu0 0.0
      %457 = vmatmul.mubr.f32.gmra.mrb[0].mxu0 %v291
      %v458 = vpop.f32.mrb[0].mxu0
      %v459 = vadd.f32 %v284, %v458
      %v460 = vpop.f32.mrb[0].mxu0
      %461 = vmatprep.mubr.f32.mxu0 0.0
      %462 = vmatmul.mubr.f32.gmra.mrb[0].mxu0 %v294
      %v463 = vpop.f32.mrb[0].mxu0
      %v464 = vadd.f32 %v284, %v463
      %v465 = vpop.f32.mrb[0].mxu0
      %466 = vmatprep.mubr.f32.mxu0 0.0
      %467 = vmatmul.mubr.f32.gmra.mrb[0].mxu0 %v297
      %v468 = vpop.f32.mrb[0].mxu0
      %v469 = vadd.f32 %v284, %v468
      %v470 = vpop.f32.mrb[0].mxu0
      %471 = vmatprep.mubr.f32.mxu0 0.0
      %472 = vmatmul.mubr.f32.gmra.mrb[0].mxu0 %v300
      %v473 = vpop.f32.mrb[0].mxu0
      %v474 = vadd.f32 %v284, %v473
      %v475 = vpop.f32.mrb[0].mxu0
      %476 = vmatprep.mubr.f32.mxu0 0.0
      %477 = vmatmul.mubr.f32.gmra.mrb[0].mxu0 %v303
      %v478 = vpop.f32.mrb[0].mxu0
      %v479 = vadd.f32 %v284, %v478
      %v480 = vpop.f32.mrb[0].mxu0
      %481 = vmatprep.mubr.f32.mxu0 0.0
      %482 = vmatmul.mubr.f32.gmra.mrb[0].mxu0 %v306
      %v483 = vpop.f32.mrb[0].mxu0
      %v484 = vadd.f32 %v284, %v483
      %v485 = vpop.f32.mrb[0].mxu0
      %486 = vmatprep.mubr.f32.mxu0 0.0
      %487 = vmatmul.mubr.f32.gmra.mrb[0].mxu0 %v309
      %v488 = vpop.f32.mrb[0].mxu0
      %v489 = vadd.f32 %v284, %v488
      %v490 = vpop.f32.mrb[0].mxu0
      %491 = vmatprep.mubr.f32.mxu0 0.0
      %492 = vmatmul.mubr.f32.gmra.mrb[0].mxu0 %v312
      %v493 = vpop.f32.mrb[0].mxu0
      %v494 = vadd.f32 %v284, %v493
      %v495 = vpop.f32.mrb[0].mxu0
      %496 = vmatprep.mubr.f32.mxu0 0.0
      %497 = vmatmul.mubr.f32.gmra.mrb[0].mxu0 %v315
      %v498 = vpop.f32.mrb[0].mxu0
      %v499 = vadd.f32 %v284, %v498
      %v500 = vpop.f32.mrb[0].mxu0
      %501 = vmatprep.mubr.f32.mxu0 0.0
      %502 = vmatmul.mubr.f32.gmra.mrb[0].mxu0 %v318
      %v503 = vpop.f32.mrb[0].mxu0
      %v504 = vadd.f32 %v284, %v503
      %v505 = vpop.f32.mrb[0].mxu0
      %506 = vmatprep.mubr.f32.mxu0 0.0
      %507 = vmatmul.mubr.f32.gmra.mrb[0].mxu0 %v321
      %v508 = vpop.f32.mrb[0].mxu0
      %v509 = vadd.f32 %v284, %v508
      %v510 = vpop.f32.mrb[0].mxu0
      %511 = vmatprep.mubr.f32.mxu0 0.0
      %512 = vmatmul.mubr.f32.gmra.mrb[0].mxu0 %v324
      %v513 = vpop.f32.mrb[0].mxu0
      %v514 = vadd.f32 %v284, %v513
      %v515 = vpop.f32.mrb[0].mxu0
      %516 = vmatprep.mubr.f32.mxu0 0.0
      %517 = vmatmul.mubr.f32.gmra.mrb[0].mxu0 %v327
      %v518 = vpop.f32.mrb[0].mxu0
      %v519 = vadd.f32 %v284, %v518
      %v520 = vpop.f32.mrb[0].mxu0
      %521 = vmatprep.mubr.f32.mxu0 0.0
      %522 = vmatmul.mubr.f32.gmra.mrb[0].mxu0 %v330
      %v523 = vpop.f32.mrb[0].mxu0
      %v524 = vadd.f32 %v284, %v523
      %v525 = vpop.f32.mrb[0].mxu0
      %526 = vmatprep.mubr.f32.mxu0 0.0
      %527 = vmatmul.mubr.f32.gmra.mrb[0].mxu0 %v333
      %v528 = vpop.f32.mrb[0].mxu0
      %v529 = vadd.f32 %v284, %v528
      %v530 = vpop.f32.mrb[0].mxu0
      %531 = vmatprep.mubr.f32.mxu0 0.0
      %532 = vmatmul.mubr.f32.gmra.mrb[0].mxu0 %v336
      %v533 = vpop.f32.mrb[0].mxu0
      %v534 = vadd.f32 %v284, %v533
      %v535 = vpop.f32.mrb[0].mxu0
      %536 = vmatprep.mubr.f32.mxu0 0.0
      %537 = vmatmul.mubr.f32.gmra.mrb[0].mxu0 %v339
      %v538 = vpop.f32.mrb[0].mxu0
      %v539 = vadd.f32 %v284, %v538
      %v540 = vpop.f32.mrb[0].mxu0
      %541 = vmatprep.mubr.f32.mxu0 0.0
      %542 = vmatmul.mubr.f32.gmra.mrb[0].mxu0 %v342
      %v543 = vpop.f32.mrb[0].mxu0
      %v544 = vadd.f32 %v284, %v543
      %v545 = vpop.f32.mrb[0].mxu0
      %546 = vmatprep.mubr.f32.mxu0 0.0
      %547 = vmatmul.mubr.f32.gmra.mrb[0].mxu0 %v345
      %v548 = vpop.f32.mrb[0].mxu0
      %v549 = vadd.f32 %v284, %v548
      %v550 = vpop.f32.mrb[0].mxu0
      %551 = vmatprep.mubr.f32.mxu0 0.0
      %552 = vmatmul.mubr.f32.gmra.mrb[0].mxu0 %v348
      %v553 = vpop.f32.mrb[0].mxu0
      %v554 = vadd.f32 %v284, %v553
      %v555 = vpop.f32.mrb[0].mxu0
      %556 = vmatprep.mubr.f32.mxu0 0.0
      %557 = vmatmul.mubr.f32.gmra.mrb[0].mxu0 %v351
      %v558 = vpop.f32.mrb[0].mxu0
      %v559 = vadd.f32 %v284, %v558
      %v560 = vpop.f32.mrb[0].mxu0
      %561 = vmatprep.mubr.f32.mxu0 0.0
      %562 = vmatmul.mubr.f32.gmra.mrb[0].mxu0 %v354
      %v563 = vpop.f32.mrb[0].mxu0
      %v564 = vadd.f32 %v284, %v563
      %v565 = vpop.f32.mrb[0].mxu0
      %566 = vmatprep.mubr.f32.mxu0 0.0
      %567 = vmatmul.mubr.f32.gmra.mrb[0].mxu0 %v357
      %v568 = vpop.f32.mrb[0].mxu0
      %v569 = vadd.f32 %v284, %v568
      %v570 = vpop.f32.mrb[0].mxu0
      %571 = vmatprep.mubr.f32.mxu0 0.0
      %572 = vmatmul.mubr.f32.gmra.mrb[0].mxu0 %v360
      %v573 = vpop.f32.mrb[0].mxu0
      %v574 = vadd.f32 %v284, %v573
      %v575 = vpop.f32.mrb[0].mxu0
      %576 = vmatprep.mubr.f32.mxu0 0.0
      %577 = vmatmul.mubr.f32.gmra.mrb[0].mxu0 %v363
      %v578 = vpop.f32.mrb[0].mxu0
      %v579 = vadd.f32 %v284, %v578
      %v580 = vpop.f32.mrb[0].mxu0
      %581 = vmatprep.mubr.f32.mxu0 0.0
      %582 = vmatmul.mubr.f32.gmra.mrb[0].mxu0 %v366
      %v583 = vpop.f32.mrb[0].mxu0
      %v584 = vadd.f32 %v284, %v583
      %v585 = vpop.f32.mrb[0].mxu0
      %586 = vmatprep.mubr.f32.mxu0 0.0
      %587 = vmatmul.mubr.f32.gmra.mrb[0].mxu0 %v369
      %v588 = vpop.f32.mrb[0].mxu0
      %v589 = vadd.f32 %v284, %v588
      %v590 = vpop.f32.mrb[0].mxu0
      %591 = vmatprep.mubr.f32.mxu0 0.0
      %592 = vmatmul.mubr.f32.gmra.mrb[0].mxu0 %v372
      %v593 = vpop.f32.mrb[0].mxu0
      %v594 = vadd.f32 %v284, %v593
      %v595 = vpop.f32.mrb[0].mxu0
      %596 = vmatprep.mubr.f32.mxu0 0.0
      %597 = vmatmul.mubr.f32.gmra.mrb[0].mxu0 %v375
      %v598 = vpop.f32.mrb[0].mxu0
      %v599 = vadd.f32 %v284, %v598
      %v600 = vpop.f32.mrb[0].mxu0
      %601 = vmatprep.mubr.f32.mxu0 0.0
      %602 = vmatmul.mubr.f32.gmra.mrb[0].mxu0 %v378
      %v603 = vpop.f32.mrb[0].mxu0
      %v604 = vadd.f32 %v284, %v603
      %v605 = vpop.f32.mrb[0].mxu0
      %606 = vmatprep.mubr.f32.mxu0 0.0
      %607 = vmatmul.mubr.f32.gmra.mrb[0].mxu0 %v381
      %v608 = vpop.f32.mrb[0].mxu0
      %v609 = vadd.f32 %v284, %v608
      %v610 = vpop.f32.mrb[0].mxu0
      %611 = vdwg.mxu0
      %vm612 = vcmp.ge.f32.partialorder %v454, 0.0
      %vm613 = vcmp.ge.f32.partialorder %v459, 0.0
      %vm614 = vcmp.ge.f32.partialorder %v464, 0.0
      %vm615 = vcmp.ge.f32.partialorder %v469, 0.0
      %vm616 = vcmp.ge.f32.partialorder %v474, 0.0
      %vm617 = vcmp.ge.f32.partialorder %v479, 0.0
      %vm618 = vcmp.ge.f32.partialorder %v484, 0.0
      %vm619 = vcmp.ge.f32.partialorder %v489, 0.0
      %vm620 = vcmp.ge.f32.partialorder %v494, 0.0
      %vm621 = vcmp.ge.f32.partialorder %v499, 0.0
      %vm622 = vcmp.ge.f32.partialorder %v504, 0.0
      %vm623 = vcmp.ge.f32.partialorder %v509, 0.0
      %vm624 = vcmp.ge.f32.partialorder %v514, 0.0
      %vm625 = vcmp.ge.f32.partialorder %v519, 0.0
      %vm626 = vcmp.ge.f32.partialorder %v524, 0.0
      %vm627 = vcmp.ge.f32.partialorder %v529, 0.0
      %vm628 = vcmp.ge.f32.partialorder %v534, 0.0
      %vm629 = vcmp.ge.f32.partialorder %v539, 0.0
      %vm630 = vcmp.ge.f32.partialorder %v544, 0.0
      %vm631 = vcmp.ge.f32.partialorder %v549, 0.0
      %vm632 = vcmp.ge.f32.partialorder %v554, 0.0
      %vm633 = vcmp.ge.f32.partialorder %v559, 0.0
      %vm634 = vcmp.ge.f32.partialorder %v564, 0.0
      %vm635 = vcmp.ge.f32.partialorder %v569, 0.0
      %vm636 = vcmp.ge.f32.partialorder %v574, 0.0
      %vm637 = vcmp.ge.f32.partialorder %v579, 0.0
      %vm638 = vcmp.ge.f32.partialorder %v584, 0.0
      %vm639 = vcmp.ge.f32.partialorder %v589, 0.0
      %vm640 = vcmp.ge.f32.partialorder %v594, 0.0
      %vm641 = vcmp.ge.f32.partialorder %v599, 0.0
      %vm642 = vcmp.ge.f32.partialorder %v604, 0.0
      %vm643 = vcmp.ge.f32.partialorder %v609, 0.0
      %v644 = vmul.f32 %v454, 0.1
      %v645 = vmul.f32 %v459, 0.1
      %v646 = vmul.f32 %v464, 0.1
      %v647 = vmul.f32 %v469, 0.1
      %v648 = vmul.f32 %v474, 0.1
      %v649 = vmul.f32 %v479, 0.1
      %v650 = vmul.f32 %v484, 0.1
      %v651 = vmul.f32 %v489, 0.1
      %v652 = vmul.f32 %v494, 0.1
      %v653 = vmul.f32 %v499, 0.1
      %v654 = vmul.f32 %v504, 0.1
      %v655 = vmul.f32 %v509, 0.1
      %v656 = vmul.f32 %v514, 0.1
      %v657 = vmul.f32 %v519, 0.1
      %v658 = vmul.f32 %v524, 0.1
      %v659 = vmul.f32 %v529, 0.1
      %v660 = vmul.f32 %v534, 0.1
      %v661 = vmul.f32 %v539, 0.1
      %v662 = vmul.f32 %v544, 0.1
      %v663 = vmul.f32 %v549, 0.1
      %v664 = vmul.f32 %v554, 0.1
      %v665 = vmul.f32 %v559, 0.1
      %v666 = vmul.f32 %v564, 0.1
      %v667 = vmul.f32 %v569, 0.1
      %v668 = vmul.f32 %v574, 0.1
      %v669 = vmul.f32 %v579, 0.1
      %v670 = vmul.f32 %v584, 0.1
      %v671 = vmul.f32 %v589, 0.1
      %v672 = vmul.f32 %v594, 0.1
      %v673 = vmul.f32 %v599, 0.1
      %v674 = vmul.f32 %v604, 0.1
      %v675 = vmul.f32 %v609, 0.1
      %v676 = vsel %vm612, %v454, %v644
      %v677 = vsel %vm613, %v459, %v645
      %v678 = vsel %vm614, %v464, %v646
      %v679 = vsel %vm615, %v469, %v647
      %v680 = vsel %vm616, %v474, %v648
      %v681 = vsel %vm617, %v479, %v649
      %v682 = vsel %vm618, %v484, %v650
      %v683 = vsel %vm619, %v489, %v651
      %v684 = vsel %vm620, %v494, %v652
      %v685 = vsel %vm621, %v499, %v653
      %v686 = vsel %vm622, %v504, %v654
      %v687 = vsel %vm623, %v509, %v655
      %v688 = vsel %vm624, %v514, %v656
      %v689 = vsel %vm625, %v519, %v657
      %v690 = vsel %vm626, %v524, %v658
      %v691 = vsel %vm627, %v529, %v659
      %v692 = vsel %vm628, %v534, %v660
      %v693 = vsel %vm629, %v539, %v661
      %v694 = vsel %vm630, %v544, %v662
      %v695 = vsel %vm631, %v549, %v663
      %v696 = vsel %vm632, %v554, %v664
      %v697 = vsel %vm633, %v559, %v665
      %v698 = vsel %vm634, %v564, %v666
      %v699 = vsel %vm635, %v569, %v667
      %v700 = vsel %vm636, %v574, %v668
      %v701 = vsel %vm637, %v579, %v669
      %v702 = vsel %vm638, %v584, %v670
      %v703 = vsel %vm639, %v589, %v671
      %v704 = vsel %vm640, %v594, %v672
      %v705 = vsel %vm641, %v599, %v673
      %v706 = vsel %vm642, %v604, %v674
      %v707 = vsel %vm643, %v609, %v675
      %vm708 = vcmask 261120
      %709 = vst.msk [vmem:[%s241] sm:$0xff] %vm708, %v676
      %710 = vst.msk [vmem:[%s241 + $0x8] sm:$0xff] %vm708, %v677
      %711 = vst.msk [vmem:[%s241 + $0x10] sm:$0xff] %vm708, %v678
      %712 = vst.msk [vmem:[%s241 + $0x18] sm:$0xff] %vm708, %v679
      %713 = vst.msk [vmem:[%s241 + $0x20] sm:$0xff] %vm708, %v680
      %714 = vst.msk [vmem:[%s241 + $0x28] sm:$0xff] %vm708, %v681
      %715 = vst.msk [vmem:[%s241 + $0x30] sm:$0xff] %vm708, %v682
      %716 = vst.msk [vmem:[%s241 + $0x38] sm:$0xff] %vm708, %v683
      %717 = vst.msk [vmem:[%s241 + $0x40] sm:$0xff] %vm708, %v684
      %718 = vst.msk [vmem:[%s241 + $0x48] sm:$0xff] %vm708, %v685
      %719 = vst.msk [vmem:[%s241 + $0x50] sm:$0xff] %vm708, %v686
      %720 = vst.msk [vmem:[%s241 + $0x58] sm:$0xff] %vm708, %v687
      %721 = vst.msk [vmem:[%s241 + $0x60] sm:$0xff] %vm708, %v688
      %722 = vst.msk [vmem:[%s241 + $0x68] sm:$0xff] %vm708, %v689
      %723 = vst.msk [vmem:[%s241 + $0x70] sm:$0xff] %vm708, %v690
      %724 = vst.msk [vmem:[%s241 + $0x78] sm:$0xff] %vm708, %v691
      %725 = vst.msk [vmem:[%s241 + $0x80] sm:$0xff] %vm708, %v692
      %726 = vst.msk [vmem:[%s241 + $0x88] sm:$0xff] %vm708, %v693
      %727 = vst.msk [vmem:[%s241 + $0x90] sm:$0xff] %vm708, %v694
      %728 = vst.msk [vmem:[%s241 + $0x98] sm:$0xff] %vm708, %v695
      %729 = vst.msk [vmem:[%s241 + $0xa0] sm:$0xff] %vm708, %v696
      %730 = vst.msk [vmem:[%s241 + $0xa8] sm:$0xff] %vm708, %v697
      %731 = vst.msk [vmem:[%s241 + $0xb0] sm:$0xff] %vm708, %v698
      %732 = vst.msk [vmem:[%s241 + $0xb8] sm:$0xff] %vm708, %v699
      %733 = vst.msk [vmem:[%s241 + $0xc0] sm:$0xff] %vm708, %v700
      %734 = vst.msk [vmem:[%s241 + $0xc8] sm:$0xff] %vm708, %v701
      %735 = vst.msk [vmem:[%s241 + $0xd0] sm:$0xff] %vm708, %v702
      %736 = vst.msk [vmem:[%s241 + $0xd8] sm:$0xff] %vm708, %v703
      %737 = vst.msk [vmem:[%s241 + $0xe0] sm:$0xff] %vm708, %v704
      %738 = vst.msk [vmem:[%s241 + $0xe8] sm:$0xff] %vm708, %v705
      %739 = vst.msk [vmem:[%s241 + $0xf0] sm:$0xff] %vm708, %v706
      %740 = vst.msk [vmem:[%s241 + $0xf8] sm:$0xff] %vm708, %v707
      %s741 = smul.u32 32, %s21
      %p742 = scmp.lt.s32.totalorder %s19, 1
      %s743 = scalar_select %p742, %s19, 1
      %p744 = scmp.lt.s32.totalorder %s741, 31
      %s745 = scalar_select %p744, %s741, 31
      %p746 = scmp.lt.s32.totalorder %s20, 0
      %s747 = scalar_select %p746, %s20, 0
      %s748 = sadd.s32 %s747, %s745
      %s749 = smul.addr %s743, 32
      %s750 = sadd.s32 %s748, %s749
      %s751 = smul.addr %s750, 8
      %s752 = scalar_lea.vmem %s3, %s751
      // Predicated region
      $region33: #{tpu_custom_call.1} parent=31 // pred_check
        %p753 = pneg %p133
      $region34: #{tpu_custom_call.1} parent=31 // pred_check_branch
        %755 = sbr.rel (%p753) target = $region36
      $region35: #{tpu_custom_call.1} parent=31 // pred_region
        %s756 = smul.u32 32, %s21
      $region36: #{tpu_custom_call.1} parent=31 // pred_fallthru
        _
    $region32: #{tpu_custom_call.1} parent=5 // pred_fallthru
      _
    %p757 = scmp.le.s32.totalorder 2, %s9
    // Predicated region
    $region37: #{tpu_custom_call.1} parent=5 // pred_check
      %p758 = pneg %p757
    $region38: #{tpu_custom_call.1} parent=5 // pred_check_branch
      %760 = sbr.rel (%p758) target = $region40
    $region39: #{tpu_custom_call.1} parent=5 // pred_region
      %s761 = ssub.s32 %s9, 2
      // Predicated region
      $region41: #{tpu_custom_call.1} parent=39 // pred_check
        %p762 = pneg %p139
      $region42: #{tpu_custom_call.1} parent=39 // pred_check_branch
        %764 = sbr.rel (%p762) target = $region44
      $region43: #{tpu_custom_call.1} parent=39 // pred_region
        %s765 = smul.u32 32, %s24
        %p766 = scmp.lt.s32.totalorder %s22, 1
        %s767 = scalar_select %p766, %s22, 1
        %p768 = scmp.lt.s32.totalorder %s765, 31
        %s769 = scalar_select %p768, %s765, 31
        %p770 = scmp.lt.s32.totalorder %s23, 0
        %s771 = scalar_select %p770, %s23, 0
        %s772 = sadd.s32 %s771, %s769
        %s773 = smul.addr %s767, 32
        %s774 = sadd.s32 %s772, %s773
        %s775 = smul.addr %s774, 8
        %s776 = scalar_lea.vmem %s3, %s775
      $region44: #{tpu_custom_call.1} parent=39 // pred_fallthru
        _
    $region40: #{tpu_custom_call.1} parent=5 // pred_fallthru
      _
  $region6: #{tpu_custom_call.1} parent=0 // loop_footer
    %s13 = sadd.s32 1, %s9
  $region7: #{tpu_custom_call.1} parent=0 // loop_footer_branch
    %8 = sbr.rel target = $region3
  $region8: #{tpu_custom_call.1} parent=0 // loop_exit
    _

</llo_original>
